<compile_context>
chip_gen: v7x
topology: tpu7x:2x2x1
jax: 0.10.0
libtpu: 0.0.40
codegen_flags: <defaults>
</compile_context>

<pallas_src>
import jax
import jax.numpy as jnp
from jax.experimental import pallas as pl
from jax.experimental.pallas import tpu as pltpu


# -----------------------------------------------------------------------------
# Model configuration (stand-in for `args`)
# -----------------------------------------------------------------------------
NUM_USERS       = 100            # args.engaging_users
LATENT_DIM_MF   = 32             # args.latent_dim_mf  (must equal layers_ncf[-1])
LATENT_DIM_MLP  = 32             # args.latent_dim_mlp
LAYERS_NCF      = [48, 64, 32]   # args.layers_ncf (forward uses exactly 2 fc layers)
TOKEN_DIM       = 32             # token_embeds_mean feature dim
FEAT_DIM        = 16             # features feature dim
BATCH           = 8

LANES    = 128                   # lane width; weights/activations padded to this
X_DIM    = TOKEN_DIM + FEAT_DIM  # 48
MLP2_OUT = 50                    # nn.Linear(latent_dim_mlp, 50)
OUT1_OUT = 20                    # nn.Linear(50 + latent_dim_mf, 20)

# Lane offsets inside the packed (B, 128) input stream.
MF_OFF   = 0                     # emb_mf   -> lanes [0, 32)
X_OFF    = LATENT_DIM_MF         # x        -> lanes [32, 80)
MLP_OFF  = X_OFF + X_DIM         # emb_mlp  -> lanes [80, 112)
MF_ROLL  = 64                    # x_mf rolled to lanes [64, 96) for the out1 fold

N_WMATS  = 5                     # W0, W1, Wm1(folded), Wm2, Wo1(folded)
N_BROWS  = 8
WO2_ROW  = 5                     # bias row holding wo2 as a (1,128) lane vector
BO2_ROW  = 6                     # bias row holding bo2 (replicated)

assert X_DIM == LAYERS_NCF[0]
assert LATENT_DIM_MF == LAYERS_NCF[-1]          # required by emb_mf * X
assert MLP_OFF + LATENT_DIM_MLP <= LANES
assert MF_ROLL >= MLP2_OUT and MF_ROLL + LATENT_DIM_MF <= LANES


# -----------------------------------------------------------------------------
# Pallas kernel: full NCF forward for one batch tile (TB rows) per grid step
# -----------------------------------------------------------------------------
def ncf_kernel(in_ref, w_ref, b_ref, out_ref):
    f32, bf16 = jnp.float32, jnp.bfloat16

    def W(k):                       # 128x128 bf16 weight block k (static slice)
        return w_ref[k * LANES:(k + 1) * LANES, :]

    def b(k):                       # (1, 128) f32 bias row
        return b_ref[k:k + 1, :]

    p = in_ref[...]                 # (TB, 128) bf16: [emb_mf | x | emb_mlp | 0]

    # fc_layers[0] + ReLU   (x lives at lanes 32..79; W0 rows 32..79 hold w0,
    # the emb lanes hit zero weight rows).  Valid output lanes 0..63.
    h = jnp.maximum(jnp.dot(p, W(0), preferred_element_type=f32) + b(0), 0.0)

    # fc_layers[1] + ReLU.  Valid lanes 0..31.
    X = jnp.maximum(
        jnp.dot(h.astype(bf16), W(1), preferred_element_type=f32) + b(1), 0.0)

    # MF branch: emb_mf sits at lanes 0..31 of the packed input, already
    # aligned with X; X is zero past lane 31, so the raw product is exact.
    x_mf = p.astype(f32) * X                            # valid lanes 0..31

    # MLP branch, mlp1 folded into ONE matmul:
    #   lanes  0..31  = X        -> Wm1 rows  0..31  (wm1[:32])
    #   lanes 80..111 = emb_mlp  -> Wm1 rows 80..111 (wm1[32:])
    #   lanes 32..79 still carry raw x but hit zero weight rows -> harmless.
    lane = jax.lax.broadcasted_iota(jnp.int32, p.shape, 1)
    mlp_in = jnp.where(lane < X_OFF, X.astype(bf16), p)
    x_mlp = jnp.maximum(
        jnp.dot(mlp_in, W(2), preferred_element_type=f32) + b(2), 0.0)
    # mlp2 + ReLU.  Valid lanes 0..49.
    x_mlp = jnp.maximum(
        jnp.dot(x_mlp.astype(bf16), W(3), preferred_element_type=f32) + b(3), 0.0)

    # out_layer1 folded into ONE matmul: roll x_mf to lanes 64..95 (XLU lane
    # rotation by exactly half a vreg) where Wo1 rows 64..95 hold wo1[50:];
    # x_mlp stays at lanes 0..49 against wo1[:50].  Disjoint lanes -> plain add.
    fuse_in = x_mlp + pltpu.roll(x_mf, shift=MF_ROLL, axis=1)
    h2 = jnp.maximum(
        jnp.dot(fuse_in.astype(bf16), W(4), preferred_element_type=f32) + b(4), 0.0)

    # out_layer2 (20 -> 1) as a VPU multiply + lane reduce (skip an N=1 MXU
    # matmul); bias row WO2_ROW holds wo2 as a (1,128) lane vector.
    logits = jnp.sum(h2 * b(WO2_ROW), axis=-1, keepdims=True)     # (TB, 1)

    # Sigmoid + scalar bias; (TB, 1) block -> 4 B/row writeback.
    out_ref[...] = jax.nn.sigmoid(logits + b_ref[BO2_ROW:BO2_ROW + 1, 0:1])


# -----------------------------------------------------------------------------
# Parameter packing: bf16 weight slab (5 x 128 x 128) + f32 bias slab (8 x 128)
# -----------------------------------------------------------------------------
def pack_params(params):
    f32, bf16 = jnp.float32, jnp.bfloat16

    def wblock(pieces):             # pieces: [(row_off, matrix), ...]
        blk = jnp.zeros((LANES, LANES), f32)
        for r, m in pieces:
            blk = blk.at[r:r + m.shape[0], :m.shape[1]].set(m)
        return blk

    wm1, wo1 = params["wm1"], params["wo1"]
    n_x = LAYERS_NCF[-1]            # rows of wm1 that multiply X
    w_slab = jnp.concatenate([
        wblock([(X_OFF, params["w0"])]),                       # fc0  (x lanes)
        wblock([(0, params["w1"])]),                           # fc1
        wblock([(0, wm1[:n_x]), (MLP_OFF, wm1[n_x:])]),        # mlp1 (folded)
        wblock([(0, params["wm2"])]),                          # mlp2
        wblock([(0, wo1[:MLP2_OUT]), (MF_ROLL, wo1[MLP2_OUT:])]),  # out1 (folded)
    ], axis=0).astype(bf16)                                    # (640, 128) bf16

    def brow(v):
        v = jnp.reshape(v, (-1,))
        return jnp.zeros((LANES,), f32).at[:v.shape[0]].set(v)

    bo2 = jnp.reshape(params["bo2"], (-1,))[0]
    b_slab = jnp.stack([
        brow(params["b0"]), brow(params["b1"]), brow(params["bm1"]),
        brow(params["bm2"]), brow(params["bo1"]),
        brow(params["wo2"][:, 0]),                  # WO2_ROW
        jnp.full((LANES,), bo2, f32),               # BO2_ROW
        jnp.zeros((LANES,), f32),
    ], axis=0)                                      # (8, 128) f32

    return {
        "w_slab": w_slab,
        "b_slab": b_slab,
        "emb_mlp": params["emb_user_mlp"].astype(bf16),
        "emb_mf":  params["emb_user_mf"].astype(bf16),
    }


# -----------------------------------------------------------------------------
# Batch tiling policy
# -----------------------------------------------------------------------------
def _batch_tiling(B):
    b8 = ((B + 7) // 8) * 8
    if b8 <= 256:                   # tiny batch: one grid step, no padding waste
        return b8, b8
    # >= 2 grid steps so ("parallel",) shards the batch across v7x's 2 TCs,
    # with the tile capped at 512 rows (overhead amortized, VMEM ~1-2 MiB).
    tb = min(512, ((b8 // 2 + 7) // 8) * 8)
    b_pad = ((b8 + tb - 1) // tb) * tb
    return tb, b_pad


# -----------------------------------------------------------------------------
# Wrapper
# -----------------------------------------------------------------------------
def ncf_forward(packed, token_embeds_mean, features, engaging_user):
    B = token_embeds_mean.shape[0]
    TB, B_pad = _batch_tiling(B)
    grid = (B_pad // TB,)

    # Glue (XLA): gather user embeddings and lane-pack everything into ONE
    # (B_pad, 128) bf16 stream: [emb_mf | token,features | emb_mlp | 0-pad].
    x = jnp.concatenate([token_embeds_mean, features], axis=1).astype(jnp.bfloat16)
    emb_mf  = jnp.take(packed["emb_mf"],  engaging_user, axis=0)
    emb_mlp = jnp.take(packed["emb_mlp"], engaging_user, axis=0)
    packed_in = jnp.concatenate([emb_mf, x, emb_mlp], axis=1)       # (B, 112)
    packed_in = jnp.pad(packed_in,
                        ((0, B_pad - B), (0, LANES - packed_in.shape[1])))

    in_spec  = pl.BlockSpec((TB, LANES), lambda i: (i, 0))
    w_spec   = pl.BlockSpec((N_WMATS * LANES, LANES), lambda i: (0, 0))  # VMEM-resident
    b_spec   = pl.BlockSpec((N_BROWS, LANES), lambda i: (0, 0))
    out_spec = pl.BlockSpec((TB, 1), lambda i: (i, 0))

    flops_per_row = 2 * (48 * 64 + 64 * 32 + 64 * 32 + 32 * 50 + 82 * 20 + 20) + 32
    cost = pl.CostEstimate(
        flops=int(B_pad * flops_per_row),
        transcendentals=int(B_pad),                     # one sigmoid per row
        bytes_accessed=int(packed_in.size * packed_in.dtype.itemsize
                           + packed["w_slab"].size * 2
                           + packed["b_slab"].size * 4
                           + B_pad * 4),
    )

    out = pl.pallas_call(
        ncf_kernel,
        out_shape=jax.ShapeDtypeStruct((B_pad, 1), jnp.float32),
        grid=grid,
        in_specs=[in_spec, w_spec, b_spec],
        out_specs=out_spec,
        compiler_params=pltpu.CompilerParams(dimension_semantics=("parallel",)),
        cost_estimate=cost,
    )(packed_in, packed["w_slab"], packed["b_slab"])

    return out[:B, 0]     # matches torch.squeeze on (B, 1) -> (B,)


# -----------------------------------------------------------------------------
# Deterministic parameter init (same layout as the PyTorch module)
# -----------------------------------------------------------------------------
def init_params(key):
    def lin(k, d_in, d_out):
        k1, k2 = jax.random.split(k)
        scale = 1.0 / jnp.sqrt(jnp.float32(d_in))
        w = jax.random.uniform(k1, (d_in, d_out), jnp.float32, -scale, scale)
        b = jax.random.uniform(k2, (1, d_out), jnp.float32, -scale, scale)
        return w, b

    keys = jax.random.split(key, 8)
    params = {}
    params["emb_user_mlp"] = jax.random.normal(keys[0], (NUM_USERS, LATENT_DIM_MLP), jnp.float32)
    params["emb_user_mf"]  = jax.random.normal(keys[1], (NUM_USERS, LATENT_DIM_MF), jnp.float32)
    params["w0"],  params["b0"]  = lin(keys[2], LAYERS_NCF[0], LAYERS_NCF[1])
    params["w1"],  params["b1"]  = lin(keys[3], LAYERS_NCF[1], LAYERS_NCF[2])
    params["wm1"], params["bm1"] = lin(keys[4], LAYERS_NCF[-1] + LATENT_DIM_MLP, LATENT_DIM_MLP)
    params["wm2"], params["bm2"] = lin(keys[5], LATENT_DIM_MLP, MLP2_OUT)
    params["wo1"], params["bo1"] = lin(keys[6], MLP2_OUT + LATENT_DIM_MF, OUT1_OUT)
    params["wo2"], params["bo2"] = lin(keys[7], OUT1_OUT, 1)
    return params


# -----------------------------------------------------------------------------
# References: full-f32, and one applying the same bf16 rounding as the kernel
# -----------------------------------------------------------------------------
def ncf_reference(params, token_embeds_mean, features, engaging_user):
    X = jnp.concatenate([token_embeds_mean, features], axis=1)
    X = jax.nn.relu(X @ params["w0"] + params["b0"])
    X = jax.nn.relu(X @ params["w1"] + params["b1"])
    emb_mlp = params["emb_user_mlp"][engaging_user]
    emb_mf  = params["emb_user_mf"][engaging_user]
    x_mf = emb_mf * X
    x_mlp = jnp.concatenate([X, emb_mlp], axis=-1)
    x_mlp = jax.nn.relu(x_mlp @ params["wm1"] + params["bm1"])
    x_mlp = jax.nn.relu(x_mlp @ params["wm2"] + params["bm2"])
    x_cat = jnp.concatenate([x_mlp, x_mf], axis=-1)
    h2 = jax.nn.relu(x_cat @ params["wo1"] + params["bo1"])
    logits = h2 @ params["wo2"] + params["bo2"]
    return jnp.squeeze(jax.nn.sigmoid(logits), axis=-1)


def ncf_reference_bf16(params, token_embeds_mean, features, engaging_user):
    bf16, f32 = jnp.bfloat16, jnp.float32
    q = lambda a: a.astype(bf16).astype(f32)

    def dot_bf16(a, w):
        return jnp.dot(a.astype(bf16), w.astype(bf16), preferred_element_type=f32)

    X = jnp.concatenate([token_embeds_mean, features], axis=1)
    X = jax.nn.relu(dot_bf16(X, params["w0"]) + params["b0"])
    X = jax.nn.relu(dot_bf16(X, params["w1"]) + params["b1"])
    emb_mlp = q(params["emb_user_mlp"][engaging_user])
    emb_mf  = q(params["emb_user_mf"][engaging_user])
    x_mf = emb_mf * X
    x_mlp = jnp.concatenate([X, emb_mlp], axis=-1)
    x_mlp = jax.nn.relu(dot_bf16(x_mlp, params["wm1"]) + params["bm1"])
    x_mlp = jax.nn.relu(dot_bf16(x_mlp, params["wm2"]) + params["bm2"])
    x_cat = jnp.concatenate([x_mlp, x_mf], axis=-1)
    h2 = jax.nn.relu(dot_bf16(x_cat, params["wo1"]) + params["bo1"])
    logits = h2 @ params["wo2"] + params["bo2"]
    return jnp.squeeze(jax.nn.sigmoid(logits), axis=-1)


if __name__ == "__main__":
    key = jax.random.PRNGKey(0)
    k_p, k_tok, k_feat, k_user = jax.random.split(key, 4)

    params = init_params(k_p)
    packed = pack_params(params)

    token_embeds_mean = jax.random.normal(k_tok, (BATCH, TOKEN_DIM), jnp.float32)
    features          = jax.random.normal(k_feat, (BATCH, FEAT_DIM), jnp.float32)
    engaging_user     = jax.random.randint(k_user, (BATCH,), 0, NUM_USERS, jnp.int32)

    engage_prob = jax.jit(ncf_forward)(packed, token_embeds_mean, features, engaging_user)
    engage_prob = jax.block_until_ready(engage_prob)
    assert engage_prob.shape == (BATCH,)

    # Tight check vs a reference that applies the same bf16 rounding as the kernel.
    ref_q = ncf_reference_bf16(params, token_embeds_mean, features, engaging_user)
    assert jnp.allclose(engage_prob, ref_q, atol=2e-3, rtol=2e-3), (
        jnp.max(jnp.abs(engage_prob - ref_q)))

    # Loose sanity check vs the full-f32 reference (bf16 rounding is the only diff).
    ref = ncf_reference(params, token_embeds_mean, features, engaging_user)
    assert jnp.allclose(engage_prob, ref, atol=2e-2, rtol=0), (
        jnp.max(jnp.abs(engage_prob - ref)))

    print("KERNEL_OK")
</pallas_src>

<mosaic_0001>
module attributes {stable_mosaic.version = 11 : i64} {
  func.func @ncf_kernel(%arg0: i32, %arg1: memref<8x128xbf16, #tpu.memory_space<vmem>>, %arg2: memref<640x128xbf16, #tpu.memory_space<vmem>>, %arg3: memref<8x128xf32, #tpu.memory_space<vmem>>, %arg4: memref<8x1xf32, #tpu.memory_space<vmem>>) attributes {dimension_semantics = [#tpu.dimension_semantics<parallel>], iteration_bounds = array<i64: 1>, scalar_prefetch = 0 : i64, scratch_operands = 0 : i64, tpu.core_type = #tpu.core_type<tc>, window_params = [{transform_indices = @transform_0, window_bounds = array<i64: 8, 128>}, {pipeline_mode = #tpu.pipeline_mode<synchronous>, transform_indices = @transform_1, window_bounds = array<i64: 640, 128>}, {pipeline_mode = #tpu.pipeline_mode<synchronous>, transform_indices = @transform_2, window_bounds = array<i64: 8, 128>}, {transform_indices = @transform_3, window_bounds = array<i64: 8, 1>}]} {
    %c0 = arith.constant 0 : index
    %c0_0 = arith.constant 0 : index
    %0 = vector.load %arg1[%c0, %c0_0] : memref<8x128xbf16, #tpu.memory_space<vmem>>, vector<8x128xbf16>
    %c0_1 = arith.constant 0 : index
    %c0_2 = arith.constant 0 : index
    %1 = vector.load %arg2[%c0_1, %c0_2] : memref<640x128xbf16, #tpu.memory_space<vmem>>, vector<128x128xbf16>
    %cst = arith.constant dense<0.000000e+00> : vector<8x128xf32>
    %2 = tpu.matmul %0, %1, %cst {dimension_numbers = #tpu.dot_dimension_numbers<[1], [0], [0], [1], [0, 0, 1, 1], [], []>} : vector<8x128xbf16>, vector<128x128xbf16>, vector<8x128xf32> -> vector<8x128xf32>
    %c0_3 = arith.constant 0 : index
    %c0_4 = arith.constant 0 : index
    %3 = vector.load %arg3[%c0_3, %c0_4] : memref<8x128xf32, #tpu.memory_space<vmem>>, vector<1x128xf32>
    %4 = vector.broadcast %3 : vector<1x128xf32> to vector<8x128xf32>
    %5 = arith.addf %2, %4 : vector<8x128xf32>
    %cst_5 = arith.constant 0.000000e+00 : f32
    %6 = vector.broadcast %cst_5 : f32 to vector<8x128xf32>
    %7 = arith.maximumf %5, %6 : vector<8x128xf32>
    %8 = arith.truncf %7 : vector<8x128xf32> to vector<8x128xbf16>
    %c128 = arith.constant 128 : index
    %c0_6 = arith.constant 0 : index
    %9 = vector.load %arg2[%c128, %c0_6] : memref<640x128xbf16, #tpu.memory_space<vmem>>, vector<128x128xbf16>
    %cst_7 = arith.constant dense<0.000000e+00> : vector<8x128xf32>
    %10 = tpu.matmul %8, %9, %cst_7 {dimension_numbers = #tpu.dot_dimension_numbers<[1], [0], [0], [1], [0, 0, 1, 1], [], []>} : vector<8x128xbf16>, vector<128x128xbf16>, vector<8x128xf32> -> vector<8x128xf32>
    %c1 = arith.constant 1 : index
    %c0_8 = arith.constant 0 : index
    %11 = vector.load %arg3[%c1, %c0_8] : memref<8x128xf32, #tpu.memory_space<vmem>>, vector<1x128xf32>
    %12 = vector.broadcast %11 : vector<1x128xf32> to vector<8x128xf32>
    %13 = arith.addf %10, %12 : vector<8x128xf32>
    %cst_9 = arith.constant 0.000000e+00 : f32
    %14 = vector.broadcast %cst_9 : f32 to vector<8x128xf32>
    %15 = arith.maximumf %13, %14 : vector<8x128xf32>
    %16 = arith.extf %0 : vector<8x128xbf16> to vector<8x128xf32>
    %17 = arith.mulf %16, %15 : vector<8x128xf32>
    %18 = tpu.iota {dimensions = array<i32: 1>} : vector<8x128xi32>
    %c32_i32 = arith.constant 32 : i32
    %19 = vector.broadcast %c32_i32 : i32 to vector<8x128xi32>
    %20 = arith.cmpi slt, %18, %19 : vector<8x128xi32>
    %21 = arith.truncf %15 : vector<8x128xf32> to vector<8x128xbf16>
    %22 = arith.select %20, %21, %0 : vector<8x128xi1>, vector<8x128xbf16>
    %c256 = arith.constant 256 : index
    %c0_10 = arith.constant 0 : index
    %23 = vector.load %arg2[%c256, %c0_10] : memref<640x128xbf16, #tpu.memory_space<vmem>>, vector<128x128xbf16>
    %cst_11 = arith.constant dense<0.000000e+00> : vector<8x128xf32>
    %24 = tpu.matmul %22, %23, %cst_11 {dimension_numbers = #tpu.dot_dimension_numbers<[1], [0], [0], [1], [0, 0, 1, 1], [], []>} : vector<8x128xbf16>, vector<128x128xbf16>, vector<8x128xf32> -> vector<8x128xf32>
    %c2 = arith.constant 2 : index
    %c0_12 = arith.constant 0 : index
    %25 = vector.load %arg3[%c2, %c0_12] : memref<8x128xf32, #tpu.memory_space<vmem>>, vector<1x128xf32>
    %26 = vector.broadcast %25 : vector<1x128xf32> to vector<8x128xf32>
    %27 = arith.addf %24, %26 : vector<8x128xf32>
    %cst_13 = arith.constant 0.000000e+00 : f32
    %28 = vector.broadcast %cst_13 : f32 to vector<8x128xf32>
    %29 = arith.maximumf %27, %28 : vector<8x128xf32>
    %30 = arith.truncf %29 : vector<8x128xf32> to vector<8x128xbf16>
    %c384 = arith.constant 384 : index
    %c0_14 = arith.constant 0 : index
    %31 = vector.load %arg2[%c384, %c0_14] : memref<640x128xbf16, #tpu.memory_space<vmem>>, vector<128x128xbf16>
    %cst_15 = arith.constant dense<0.000000e+00> : vector<8x128xf32>
    %32 = tpu.matmul %30, %31, %cst_15 {dimension_numbers = #tpu.dot_dimension_numbers<[1], [0], [0], [1], [0, 0, 1, 1], [], []>} : vector<8x128xbf16>, vector<128x128xbf16>, vector<8x128xf32> -> vector<8x128xf32>
    %c3 = arith.constant 3 : index
    %c0_16 = arith.constant 0 : index
    %33 = vector.load %arg3[%c3, %c0_16] : memref<8x128xf32, #tpu.memory_space<vmem>>, vector<1x128xf32>
    %34 = vector.broadcast %33 : vector<1x128xf32> to vector<8x128xf32>
    %35 = arith.addf %32, %34 : vector<8x128xf32>
    %cst_17 = arith.constant 0.000000e+00 : f32
    %36 = vector.broadcast %cst_17 : f32 to vector<8x128xf32>
    %37 = arith.maximumf %35, %36 : vector<8x128xf32>
    %c64_i32 = arith.constant 64 : i32
    %38 = tpu.dynamic_rotate %17 by %c64_i32 dim 1 : vector<8x128xf32>, i32 -> vector<8x128xf32>
    %39 = arith.addf %37, %38 : vector<8x128xf32>
    %40 = arith.truncf %39 : vector<8x128xf32> to vector<8x128xbf16>
    %c512 = arith.constant 512 : index
    %c0_18 = arith.constant 0 : index
    %41 = vector.load %arg2[%c512, %c0_18] : memref<640x128xbf16, #tpu.memory_space<vmem>>, vector<128x128xbf16>
    %cst_19 = arith.constant dense<0.000000e+00> : vector<8x128xf32>
    %42 = tpu.matmul %40, %41, %cst_19 {dimension_numbers = #tpu.dot_dimension_numbers<[1], [0], [0], [1], [0, 0, 1, 1], [], []>} : vector<8x128xbf16>, vector<128x128xbf16>, vector<8x128xf32> -> vector<8x128xf32>
    %c4 = arith.constant 4 : index
    %c0_20 = arith.constant 0 : index
    %43 = vector.load %arg3[%c4, %c0_20] : memref<8x128xf32, #tpu.memory_space<vmem>>, vector<1x128xf32>
    %44 = vector.broadcast %43 : vector<1x128xf32> to vector<8x128xf32>
    %45 = arith.addf %42, %44 : vector<8x128xf32>
    %cst_21 = arith.constant 0.000000e+00 : f32
    %46 = vector.broadcast %cst_21 : f32 to vector<8x128xf32>
    %47 = arith.maximumf %45, %46 : vector<8x128xf32>
    %c5 = arith.constant 5 : index
    %c0_22 = arith.constant 0 : index
    %48 = vector.load %arg3[%c5, %c0_22] : memref<8x128xf32, #tpu.memory_space<vmem>>, vector<1x128xf32>
    %49 = vector.broadcast %48 : vector<1x128xf32> to vector<8x128xf32>
    %50 = arith.mulf %47, %49 : vector<8x128xf32>
    %cst_23 = arith.constant dense<0.000000e+00> : vector<8xf32>
    %51 = vector.multi_reduction <add>, %50, %cst_23 [1] : vector<8x128xf32> to vector<8xf32>
    %52 = vector.shape_cast %51 : vector<8xf32> to vector<8x1xf32>
    %c6 = arith.constant 6 : index
    %c0_24 = arith.constant 0 : index
    %53 = vector.load %arg3[%c6, %c0_24] : memref<8x128xf32, #tpu.memory_space<vmem>>, vector<1x1xf32>
    %54 = vector.broadcast %53 : vector<1x1xf32> to vector<8x1xf32>
    %55 = arith.addf %52, %54 : vector<8x1xf32>
    %56 = arith.negf %55 : vector<8x1xf32>
    %57 = math.exp %56 : vector<8x1xf32>
    %cst_25 = arith.constant 1.000000e+00 : f32
    %58 = vector.broadcast %cst_25 : f32 to vector<8x1xf32>
    %59 = arith.addf %58, %57 : vector<8x1xf32>
    %60 = arith.divf %58, %59 : vector<8x1xf32>
    %c0_26 = arith.constant 0 : index
    %c0_27 = arith.constant 0 : index
    %61 = vector.load %arg4[%c0_26, %c0_27] : memref<8x1xf32, #tpu.memory_space<vmem>>, vector<8x1xf32>
    tpu.vector_store %arg4[%c0_26, %c0_27], %60 {strides = array<i32>} : memref<8x1xf32, #tpu.memory_space<vmem>>, vector<8x1xf32>,
    return
  }
  func.func @transform_0(%arg0: i32) -> (i32, i32) {
    %c0_i32 = arith.constant 0 : i32
    %c0_i32_0 = arith.constant 0 : i32
    return %arg0, %c0_i32 : i32, i32
  }
  func.func @transform_1(%arg0: i32) -> (i32, i32) {
    %c0_i32 = arith.constant 0 : i32
    %c0_i32_0 = arith.constant 0 : i32
    %c0_i32_1 = arith.constant 0 : i32
    return %c0_i32, %c0_i32_0 : i32, i32
  }
  func.func @transform_2(%arg0: i32) -> (i32, i32) {
    %c0_i32 = arith.constant 0 : i32
    %c0_i32_0 = arith.constant 0 : i32
    %c0_i32_1 = arith.constant 0 : i32
    return %c0_i32, %c0_i32_0 : i32, i32
  }
  func.func @transform_3(%arg0: i32) -> (i32, i32) {
    %c0_i32 = arith.constant 0 : i32
    %c0_i32_0 = arith.constant 0 : i32
    return %arg0, %c0_i32 : i32, i32
  }
}

</mosaic_0001>

<llo_original>
// kernel: ncf_forward.1
$region0: #{ncf_forward.1}
  #allocation0 [shape = 'u32[]', space=smem, size = 0x4, offset = 0x4, fixed_abs, tag = 'smem constant byte address 0x4 - core index']
  #allocation1 [shape = 'u32[144,128]{1,0:T(1,128)}', space=vmem, size = 0x12000, scoped, tag = 'internal scratch']
  %s0 = inlined_call_operand.vmem [shape: bf16[8,128], index: 0, kind: input, shape index: {}]
  %s1 = inlined_call_operand.hbm [shape: bf16[640,128], index: 1, kind: input, shape index: {}]
  %s2 = inlined_call_operand.vmem [shape: f32[8,128], index: 2, kind: input, shape index: {}]
  %s3 = inlined_call_operand.vmem [shape: f32[8,1], index: 3, kind: output, shape index: {}]
  %s4 = sld [smem:[#allocation0]]
  $region26: #{ncf_forward.1} parent=0
    _
  %s6 = ssub.s32 1, %s4
  %s7 = scalar_select 0, %s6, %s4
  $region1: #{ncf_forward.1} parent=0
    #allocation2 [shape = 'u8[163840]{0}', space=vmem, size = 0x28000, scoped, tag = 'input window, operand 1, single buffered']
    #allocation3 [shape = 's32[1]{0}', space=sflag, size = 0x4, scoped, tag = 'scoped memory for ncf_forward.1']
    %8 = vsyncpa [#allocation3], 0
    // Predicated region
    $region2: #{ncf_forward.1} parent=1 // pred_check
      _
    $region3: #{ncf_forward.1} parent=1 // pred_check_branch
      %10 = sbr.rel (0) target = $region5
    $region4: #{ncf_forward.1} parent=1 // pred_region
      _
    $region5: #{ncf_forward.1} parent=1 // pred_fallthru
      _
    // Predicated region
    $region6: #{ncf_forward.1} parent=1 // pred_check
      _
    $region7: #{ncf_forward.1} parent=1 // pred_check_branch
      %12 = sbr.rel (0) target = $region9
    $region8: #{ncf_forward.1} parent=1 // pred_region
      %s14 = ssub.s32 5120, 5120
      %15 = vsyncadd [#allocation3], %s14
      %s16 = sshll.u32 [#allocation2], 4
      %s17 = int_to_ptr.vmem [resolvable:$true] %s16
      %22 = dma.hbm_to_vmem [thread:$0]  %s1, 5120, %s17, [#allocation3], 64, 64, 4
    $region9: #{ncf_forward.1} parent=1 // pred_fallthru
      _
    // Predicated region
    $region10: #{ncf_forward.1} parent=1 // pred_check
      _
    $region11: #{ncf_forward.1} parent=1 // pred_check_branch
      %24 = sbr.rel (0) target = $region13
    $region12: #{ncf_forward.1} parent=1 // pred_region
      _
    $region13: #{ncf_forward.1} parent=1 // pred_fallthru
      _
    // Predicated region
    $region14: #{ncf_forward.1} parent=1 // pred_check
      _
    $region15: #{ncf_forward.1} parent=1 // pred_check_branch
      %26 = sbr.rel (0) target = $region17
    $region16: #{ncf_forward.1} parent=1 // pred_region
      %27 = dma.done [#allocation3], 5120
    $region17: #{ncf_forward.1} parent=1 // pred_fallthru
      _
    %v29 = vld [vmem:[%s0] sm:$0xf]
    %v30 = vld [vmem:[#allocation2] sm:$0xf]
    %v31 = vld [vmem:[#allocation2 + $0x4] sm:$0xf]
    %v32 = vld [vmem:[#allocation2 + $0x8] sm:$0xf]
    %v33 = vld [vmem:[#allocation2 + $0xc] sm:$0xf]
    %v34 = vld [vmem:[#allocation2 + $0x10] sm:$0xf]
    %v35 = vld [vmem:[#allocation2 + $0x14] sm:$0xf]
    %v36 = vld [vmem:[#allocation2 + $0x18] sm:$0xf]
    %v37 = vld [vmem:[#allocation2 + $0x1c] sm:$0xf]
    %v38 = vld [vmem:[#allocation2 + $0x20] sm:$0xf]
    %v39 = vld [vmem:[#allocation2 + $0x24] sm:$0xf]
    %v40 = vld [vmem:[#allocation2 + $0x28] sm:$0xf]
    %v41 = vld [vmem:[#allocation2 + $0x2c] sm:$0xf]
    %v42 = vld [vmem:[#allocation2 + $0x30] sm:$0xf]
    %v43 = vld [vmem:[#allocation2 + $0x34] sm:$0xf]
    %v44 = vld [vmem:[#allocation2 + $0x38] sm:$0xf]
    %v45 = vld [vmem:[#allocation2 + $0x3c] sm:$0xf]
    %v46 = vld [vmem:[%s2] sm:$0x1]
    %v47 = vlaneseq
    %v48 = vshrl.u32 %v47, 7
    %v49 = vsub.s32 0, %v48
    %v50 = vrot.slane %v46, %v49
    %v67 = vunpack.c.l.b16 %v30
    %v68 = vunpack.c.l.b16 %v31
    %v69 = vunpack.c.l.b16 %v32
    %v70 = vunpack.c.l.b16 %v33
    %v71 = vunpack.c.l.b16 %v34
    %v72 = vunpack.c.l.b16 %v35
    %v73 = vunpack.c.l.b16 %v36
    %v74 = vunpack.c.l.b16 %v37
    %v75 = vunpack.c.l.b16 %v38
    %v76 = vunpack.c.l.b16 %v39
    %v77 = vunpack.c.l.b16 %v40
    %v78 = vunpack.c.l.b16 %v41
    %v79 = vunpack.c.l.b16 %v42
    %v80 = vunpack.c.l.b16 %v43
    %v81 = vunpack.c.l.b16 %v44
    %v82 = vunpack.c.l.b16 %v45
    %v83 = vpack.c.b16 %v68, %v67
    %v84 = vpack.c.b16 %v70, %v69
    %v85 = vpack.c.b16 %v72, %v71
    %v86 = vpack.c.b16 %v74, %v73
    %v87 = vpack.c.b16 %v76, %v75
    %v88 = vpack.c.b16 %v78, %v77
    %v89 = vpack.c.b16 %v80, %v79
    %v90 = vpack.c.b16 %v82, %v81
    %99 = vmatprep.subr.bf16.mxu0 0
    %100 = vmatpush1.bf16.msra.mxu0 %v83
    %101 = vmatprep.subr.bf16.mxu0 0
    %102 = vmatpush1.bf16.msra.mxu0 %v84
    %103 = vmatprep.subr.bf16.mxu0 0
    %104 = vmatpush1.bf16.msra.mxu0 %v85
    %105 = vmatprep.subr.bf16.mxu0 0
    %106 = vmatpush1.bf16.msra.mxu0 %v86
    %107 = vmatprep.subr.bf16.mxu0 0
    %108 = vmatpush1.bf16.msra.mxu0 %v87
    %109 = vmatprep.subr.bf16.mxu0 0
    %110 = vmatpush1.bf16.msra.mxu0 %v88
    %111 = vmatprep.subr.bf16.mxu0 0
    %112 = vmatpush1.bf16.msra.mxu0 %v89
    %113 = vmatprep.subr.bf16.mxu0 0
    %114 = vmatpush1.bf16.msra.mxu0 %v90
    %115 = vmatprep.subr.bf16.mxu0 0
    %116 = vmatpush1.bf16.msra.mxu0 0
    %117 = vmatprep.subr.bf16.mxu0 0
    %118 = vmatpush1.bf16.msra.mxu0 0
    %119 = vmatprep.subr.bf16.mxu0 0
    %120 = vmatpush1.bf16.msra.mxu0 0
    %121 = vmatprep.subr.bf16.mxu0 0
    %122 = vmatpush1.bf16.msra.mxu0 0
    %123 = vmatprep.subr.bf16.mxu0 0
    %124 = vmatpush1.bf16.msra.mxu0 0
    %125 = vmatprep.subr.bf16.mxu0 0
    %126 = vmatpush1.bf16.msra.mxu0 0
    %127 = vmatprep.subr.bf16.mxu0 0
    %128 = vmatpush1.bf16.msra.mxu0 0
    %129 = vmatprep.subr.bf16.mxu0 0
    %130 = vmatpush1.bf16.msra.mxu0 0
    %131 = vmatprep.mubr.bf16.mxu0 0
    %132 = vmatmul.mubr.bf16.gmra.mrb[0].mxu0 %v29
    %v133 = vpop.f32.mrb[0].mxu0
    %v134 = vadd.f32 %v50, %v133
    %v135 = vpop.f32.mrb[0].mxu0
    %v136 = vpop.f32.mrb[0].mxu0
    %v137 = vpop.f32.mrb[0].mxu0
    %138 = vdwg.mxu0
    %v139 = vmax.f32 %v134, 0.0
    %v140 = vpack.c.bf16 %v139, %v139
    %v141 = vld [vmem:[#allocation2 + $0x40] sm:$0xf]
    %v142 = vld [vmem:[#allocation2 + $0x44] sm:$0xf]
    %v143 = vld [vmem:[#allocation2 + $0x48] sm:$0xf]
    %v144 = vld [vmem:[#allocation2 + $0x4c] sm:$0xf]
    %v145 = vld [vmem:[#allocation2 + $0x50] sm:$0xf]
    %v146 = vld [vmem:[#allocation2 + $0x54] sm:$0xf]
    %v147 = vld [vmem:[#allocation2 + $0x58] sm:$0xf]
    %v148 = vld [vmem:[#allocation2 + $0x5c] sm:$0xf]
    %v149 = vld [vmem:[#allocation2 + $0x60] sm:$0xf]
    %v150 = vld [vmem:[#allocation2 + $0x64] sm:$0xf]
    %v151 = vld [vmem:[#allocation2 + $0x68] sm:$0xf]
    %v152 = vld [vmem:[#allocation2 + $0x6c] sm:$0xf]
    %v153 = vld [vmem:[#allocation2 + $0x70] sm:$0xf]
    %v154 = vld [vmem:[#allocation2 + $0x74] sm:$0xf]
    %v155 = vld [vmem:[#allocation2 + $0x78] sm:$0xf]
    %v156 = vld [vmem:[#allocation2 + $0x7c] sm:$0xf]
    %v157 = vld [vmem:[%s2 + $0x1] sm:$0x1]
    %v158 = vlaneseq
    %v159 = vshrl.u32 %v158, 7
    %v160 = vsub.s32 0, %v159
    %v161 = vrot.slane %v157, %v160
    %v178 = vunpack.c.l.b16 %v141
    %v179 = vunpack.c.l.b16 %v142
    %v180 = vunpack.c.l.b16 %v143
    %v181 = vunpack.c.l.b16 %v144
    %v182 = vunpack.c.l.b16 %v145
    %v183 = vunpack.c.l.b16 %v146
    %v184 = vunpack.c.l.b16 %v147
    %v185 = vunpack.c.l.b16 %v148
    %v186 = vunpack.c.l.b16 %v149
    %v187 = vunpack.c.l.b16 %v150
    %v188 = vunpack.c.l.b16 %v151
    %v189 = vunpack.c.l.b16 %v152
    %v190 = vunpack.c.l.b16 %v153
    %v191 = vunpack.c.l.b16 %v154
    %v192 = vunpack.c.l.b16 %v155
    %v193 = vunpack.c.l.b16 %v156
    %v194 = vpack.c.b16 %v179, %v178
    %v195 = vpack.c.b16 %v181, %v180
    %v196 = vpack.c.b16 %v183, %v182
    %v197 = vpack.c.b16 %v185, %v184
    %v198 = vpack.c.b16 %v187, %v186
    %v199 = vpack.c.b16 %v189, %v188
    %v200 = vpack.c.b16 %v191, %v190
    %v201 = vpack.c.b16 %v193, %v192
    %210 = vmatprep.subr.bf16.mxu0 0
    %211 = vmatpush1.bf16.msra.mxu0 %v194
    %212 = vmatprep.subr.bf16.mxu0 0
    %213 = vmatpush1.bf16.msra.mxu0 %v195
    %214 = vmatprep.subr.bf16.mxu0 0
    %215 = vmatpush1.bf16.msra.mxu0 %v196
    %216 = vmatprep.subr.bf16.mxu0 0
    %217 = vmatpush1.bf16.msra.mxu0 %v197
    %218 = vmatprep.subr.bf16.mxu0 0
    %219 = vmatpush1.bf16.msra.mxu0 %v198
    %220 = vmatprep.subr.bf16.mxu0 0
    %221 = vmatpush1.bf16.msra.mxu0 %v199
    %222 = vmatprep.subr.bf16.mxu0 0
    %223 = vmatpush1.bf16.msra.mxu0 %v200
    %224 = vmatprep.subr.bf16.mxu0 0
    %225 = vmatpush1.bf16.msra.mxu0 %v201
    %226 = vmatprep.subr.bf16.mxu0 0
    %227 = vmatpush1.bf16.msra.mxu0 0
    %228 = vmatprep.subr.bf16.mxu0 0
    %229 = vmatpush1.bf16.msra.mxu0 0
    %230 = vmatprep.subr.bf16.mxu0 0
    %231 = vmatpush1.bf16.msra.mxu0 0
    %232 = vmatprep.subr.bf16.mxu0 0
    %233 = vmatpush1.bf16.msra.mxu0 0
    %234 = vmatprep.subr.bf16.mxu0 0
    %235 = vmatpush1.bf16.msra.mxu0 0
    %236 = vmatprep.subr.bf16.mxu0 0
    %237 = vmatpush1.bf16.msra.mxu0 0
    %238 = vmatprep.subr.bf16.mxu0 0
    %239 = vmatpush1.bf16.msra.mxu0 0
    %240 = vmatprep.subr.bf16.mxu0 0
    %241 = vmatpush1.bf16.msra.mxu0 0
    %242 = vmatprep.mubr.bf16.mxu0 0
    %243 = vmatmul.mubr.bf16.gmra.mrb[0].mxu0 %v140
    %v244 = vpop.f32.mrb[0].mxu0
    %v245 = vadd.f32 %v161, %v244
    %v246 = vpop.f32.mrb[0].mxu0
    %v247 = vpop.f32.mrb[0].mxu0
    %v248 = vpop.f32.mrb[0].mxu0
    %249 = vdwg.mxu0
    %v250 = vmax.f32 %v245, 0.0
    %v251 = vunpack.c.l.bf16 %v29
    %v252 = vmul.f32 %v251, %v250
    %v253 = vlaneseq
    %v254 = vand.u32 %v253, 127
    %vm255 = vcmp.lt.s32.totalorder %v254, 32
    %v256 = vpack.c.bf16 %v250, %v250
    %vm257 = vmpackc.low %vm255, %vm255
    %v258 = vsel %vm257, %v256, %v29
    %v259 = vld [vmem:[#allocation2 + $0x80] sm:$0xf]
    %v260 = vld [vmem:[#allocation2 + $0x84] sm:$0xf]
    %v261 = vld [vmem:[#allocation2 + $0x88] sm:$0xf]
    %v262 = vld [vmem:[#allocation2 + $0x8c] sm:$0xf]
    %v263 = vld [vmem:[#allocation2 + $0x90] sm:$0xf]
    %v264 = vld [vmem:[#allocation2 + $0x94] sm:$0xf]
    %v265 = vld [vmem:[#allocation2 + $0x98] sm:$0xf]
    %v266 = vld [vmem:[#allocation2 + $0x9c] sm:$0xf]
    %v267 = vld [vmem:[#allocation2 + $0xa0] sm:$0xf]
    %v268 = vld [vmem:[#allocation2 + $0xa4] sm:$0xf]
    %v269 = vld [vmem:[#allocation2 + $0xa8] sm:$0xf]
    %v270 = vld [vmem:[#allocation2 + $0xac] sm:$0xf]
    %v271 = vld [vmem:[#allocation2 + $0xb0] sm:$0xf]
    %v272 = vld [vmem:[#allocation2 + $0xb4] sm:$0xf]
    %v273 = vld [vmem:[#allocation2 + $0xb8] sm:$0xf]
    %v274 = vld [vmem:[#allocation2 + $0xbc] sm:$0xf]
    %v275 = vld [vmem:[%s2 + $0x2] sm:$0x1]
    %v276 = vlaneseq
    %v277 = vshrl.u32 %v276, 7
    %v278 = vsub.s32 0, %v277
    %v279 = vrot.slane %v275, %v278
    %v296 = vunpack.c.l.b16 %v259
    %v297 = vunpack.c.l.b16 %v260
    %v298 = vunpack.c.l.b16 %v261
    %v299 = vunpack.c.l.b16 %v262
    %v300 = vunpack.c.l.b16 %v263
    %v301 = vunpack.c.l.b16 %v264
    %v302 = vunpack.c.l.b16 %v265
    %v303 = vunpack.c.l.b16 %v266
    %v304 = vunpack.c.l.b16 %v267
    %v305 = vunpack.c.l.b16 %v268
    %v306 = vunpack.c.l.b16 %v269
    %v307 = vunpack.c.l.b16 %v270
    %v308 = vunpack.c.l.b16 %v271
    %v309 = vunpack.c.l.b16 %v272
    %v310 = vunpack.c.l.b16 %v273
    %v311 = vunpack.c.l.b16 %v274
    %v312 = vpack.c.b16 %v297, %v296
    %v313 = vpack.c.b16 %v299, %v298
    %v314 = vpack.c.b16 %v301, %v300
    %v315 = vpack.c.b16 %v303, %v302
    %v316 = vpack.c.b16 %v305, %v304
    %v317 = vpack.c.b16 %v307, %v306
    %v318 = vpack.c.b16 %v309, %v308
    %v319 = vpack.c.b16 %v311, %v310
    %328 = vmatprep.subr.bf16.mxu0 0
    %329 = vmatpush1.bf16.msra.mxu0 %v312
    %330 = vmatprep.subr.bf16.mxu0 0
    %331 = vmatpush1.bf16.msra.mxu0 %v313
    %332 = vmatprep.subr.bf16.mxu0 0
    %333 = vmatpush1.bf16.msra.mxu0 %v314
    %334 = vmatprep.subr.bf16.mxu0 0
    %335 = vmatpush1.bf16.msra.mxu0 %v315
    %336 = vmatprep.subr.bf16.mxu0 0
    %337 = vmatpush1.bf16.msra.mxu0 %v316
    %338 = vmatprep.subr.bf16.mxu0 0
    %339 = vmatpush1.bf16.msra.mxu0 %v317
    %340 = vmatprep.subr.bf16.mxu0 0
    %341 = vmatpush1.bf16.msra.mxu0 %v318
    %342 = vmatprep.subr.bf16.mxu0 0
    %343 = vmatpush1.bf16.msra.mxu0 %v319
    %344 = vmatprep.subr.bf16.mxu0 0
    %345 = vmatpush1.bf16.msra.mxu0 0
    %346 = vmatprep.subr.bf16.mxu0 0
    %347 = vmatpush1.bf16.msra.mxu0 0
    %348 = vmatprep.subr.bf16.mxu0 0
    %349 = vmatpush1.bf16.msra.mxu0 0
    %350 = vmatprep.subr.bf16.mxu0 0
    %351 = vmatpush1.bf16.msra.mxu0 0
    %352 = vmatprep.subr.bf16.mxu0 0
    %353 = vmatpush1.bf16.msra.mxu0 0
    %354 = vmatprep.subr.bf16.mxu0 0
    %355 = vmatpush1.bf16.msra.mxu0 0
    %356 = vmatprep.subr.bf16.mxu0 0
    %357 = vmatpush1.bf16.msra.mxu0 0
    %358 = vmatprep.subr.bf16.mxu0 0
    %359 = vmatpush1.bf16.msra.mxu0 0
    %360 = vmatprep.mubr.bf16.mxu0 0
    %361 = vmatmul.mubr.bf16.gmra.mrb[0].mxu0 %v258
    %v362 = vpop.f32.mrb[0].mxu0
    %v363 = vadd.f32 %v279, %v362
    %v364 = vpop.f32.mrb[0].mxu0
    %v365 = vpop.f32.mrb[0].mxu0
    %v366 = vpop.f32.mrb[0].mxu0
    %367 = vdwg.mxu0
    %v368 = vmax.f32 %v363, 0.0
    %v369 = vpack.c.bf16 %v368, %v368
    %v370 = vld [vmem:[#allocation2 + $0xc0] sm:$0xf]
    %v371 = vld [vmem:[#allocation2 + $0xc4] sm:$0xf]
    %v372 = vld [vmem:[#allocation2 + $0xc8] sm:$0xf]
    %v373 = vld [vmem:[#allocation2 + $0xcc] sm:$0xf]
    %v374 = vld [vmem:[#allocation2 + $0xd0] sm:$0xf]
    %v375 = vld [vmem:[#allocation2 + $0xd4] sm:$0xf]
    %v376 = vld [vmem:[#allocation2 + $0xd8] sm:$0xf]
    %v377 = vld [vmem:[#allocation2 + $0xdc] sm:$0xf]
    %v378 = vld [vmem:[#allocation2 + $0xe0] sm:$0xf]
    %v379 = vld [vmem:[#allocation2 + $0xe4] sm:$0xf]
    %v380 = vld [vmem:[#allocation2 + $0xe8] sm:$0xf]
    %v381 = vld [vmem:[#allocation2 + $0xec] sm:$0xf]
    %v382 = vld [vmem:[#allocation2 + $0xf0] sm:$0xf]
    %v383 = vld [vmem:[#allocation2 + $0xf4] sm:$0xf]
    %v384 = vld [vmem:[#allocation2 + $0xf8] sm:$0xf]
    %v385 = vld [vmem:[#allocation2 + $0xfc] sm:$0xf]
    %v386 = vld [vmem:[%s2 + $0x3] sm:$0x1]
    %v387 = vlaneseq
    %v388 = vshrl.u32 %v387, 7
    %v389 = vsub.s32 0, %v388
    %v390 = vrot.slane %v386, %v389
    %v407 = vunpack.c.l.b16 %v370
    %v408 = vunpack.c.l.b16 %v371
    %v409 = vunpack.c.l.b16 %v372
    %v410 = vunpack.c.l.b16 %v373
    %v411 = vunpack.c.l.b16 %v374
    %v412 = vunpack.c.l.b16 %v375
    %v413 = vunpack.c.l.b16 %v376
    %v414 = vunpack.c.l.b16 %v377
    %v415 = vunpack.c.l.b16 %v378
    %v416 = vunpack.c.l.b16 %v379
    %v417 = vunpack.c.l.b16 %v380
    %v418 = vunpack.c.l.b16 %v381
    %v419 = vunpack.c.l.b16 %v382
    %v420 = vunpack.c.l.b16 %v383
    %v421 = vunpack.c.l.b16 %v384
    %v422 = vunpack.c.l.b16 %v385
    %v423 = vpack.c.b16 %v408, %v407
    %v424 = vpack.c.b16 %v410, %v409
    %v425 = vpack.c.b16 %v412, %v411
    %v426 = vpack.c.b16 %v414, %v413
    %v427 = vpack.c.b16 %v416, %v415
    %v428 = vpack.c.b16 %v418, %v417
    %v429 = vpack.c.b16 %v420, %v419
    %v430 = vpack.c.b16 %v422, %v421
    %439 = vmatprep.subr.bf16.mxu0 0
    %440 = vmatpush1.bf16.msra.mxu0 %v423
    %441 = vmatprep.subr.bf16.mxu0 0
    %442 = vmatpush1.bf16.msra.mxu0 %v424
    %443 = vmatprep.subr.bf16.mxu0 0
    %444 = vmatpush1.bf16.msra.mxu0 %v425
    %445 = vmatprep.subr.bf16.mxu0 0
    %446 = vmatpush1.bf16.msra.mxu0 %v426
    %447 = vmatprep.subr.bf16.mxu0 0
    %448 = vmatpush1.bf16.msra.mxu0 %v427
    %449 = vmatprep.subr.bf16.mxu0 0
    %450 = vmatpush1.bf16.msra.mxu0 %v428
    %451 = vmatprep.subr.bf16.mxu0 0
    %452 = vmatpush1.bf16.msra.mxu0 %v429
    %453 = vmatprep.subr.bf16.mxu0 0
    %454 = vmatpush1.bf16.msra.mxu0 %v430
    %455 = vmatprep.subr.bf16.mxu0 0
    %456 = vmatpush1.bf16.msra.mxu0 0
    %457 = vmatprep.subr.bf16.mxu0 0
    %458 = vmatpush1.bf16.msra.mxu0 0
    %459 = vmatprep.subr.bf16.mxu0 0
    %460 = vmatpush1.bf16.msra.mxu0 0
    %461 = vmatprep.subr.bf16.mxu0 0
    %462 = vmatpush1.bf16.msra.mxu0 0
    %463 = vmatprep.subr.bf16.mxu0 0
    %464 = vmatpush1.bf16.msra.mxu0 0
    %465 = vmatprep.subr.bf16.mxu0 0
    %466 = vmatpush1.bf16.msra.mxu0 0
    %467 = vmatprep.subr.bf16.mxu0 0
    %468 = vmatpush1.bf16.msra.mxu0 0
    %469 = vmatprep.subr.bf16.mxu0 0
    %470 = vmatpush1.bf16.msra.mxu0 0
    %471 = vmatprep.mubr.bf16.mxu0 0
    %472 = vmatmul.mubr.bf16.gmra.mrb[0].mxu0 %v369
    %v473 = vpop.f32.mrb[0].mxu0
    %v474 = vadd.f32 %v390, %v473
    %v475 = vpop.f32.mrb[0].mxu0
    %v476 = vpop.f32.mrb[0].mxu0
    %v477 = vpop.f32.mrb[0].mxu0
    %478 = vdwg.mxu0
    %v479 = vmax.f32 %v474, 0.0
    %480 = vrot.lane.b32.xlu0 %v252, 64
    %v481 = vpop.permute.xlu0 %480
    %v482 = vadd.f32 %v479, %v481
    %v483 = vpack.c.bf16 %v482, %v482
    %v484 = vld [vmem:[#allocation2 + $0x100] sm:$0xf]
    %v485 = vld [vmem:[#allocation2 + $0x104] sm:$0xf]
    %v486 = vld [vmem:[#allocation2 + $0x108] sm:$0xf]
    %v487 = vld [vmem:[#allocation2 + $0x10c] sm:$0xf]
    %v488 = vld [vmem:[#allocation2 + $0x110] sm:$0xf]
    %v489 = vld [vmem:[#allocation2 + $0x114] sm:$0xf]
    %v490 = vld [vmem:[#allocation2 + $0x118] sm:$0xf]
    %v491 = vld [vmem:[#allocation2 + $0x11c] sm:$0xf]
    %v492 = vld [vmem:[#allocation2 + $0x120] sm:$0xf]
    %v493 = vld [vmem:[#allocation2 + $0x124] sm:$0xf]
    %v494 = vld [vmem:[#allocation2 + $0x128] sm:$0xf]
    %v495 = vld [vmem:[#allocation2 + $0x12c] sm:$0xf]
    %v496 = vld [vmem:[#allocation2 + $0x130] sm:$0xf]
    %v497 = vld [vmem:[#allocation2 + $0x134] sm:$0xf]
    %v498 = vld [vmem:[#allocation2 + $0x138] sm:$0xf]
    %v499 = vld [vmem:[#allocation2 + $0x13c] sm:$0xf]
    %v500 = vld [vmem:[%s2 + $0x4] sm:$0x1]
    %v501 = vlaneseq
    %v502 = vshrl.u32 %v501, 7
    %v503 = vsub.s32 0, %v502
    %v504 = vrot.slane %v500, %v503
    %v521 = vunpack.c.l.b16 %v484
    %v522 = vunpack.c.l.b16 %v485
    %v523 = vunpack.c.l.b16 %v486
    %v524 = vunpack.c.l.b16 %v487
    %v525 = vunpack.c.l.b16 %v488
    %v526 = vunpack.c.l.b16 %v489
    %v527 = vunpack.c.l.b16 %v490
    %v528 = vunpack.c.l.b16 %v491
    %v529 = vunpack.c.l.b16 %v492
    %v530 = vunpack.c.l.b16 %v493
    %v531 = vunpack.c.l.b16 %v494
    %v532 = vunpack.c.l.b16 %v495
    %v533 = vunpack.c.l.b16 %v496
    %v534 = vunpack.c.l.b16 %v497
    %v535 = vunpack.c.l.b16 %v498
    %v536 = vunpack.c.l.b16 %v499
    %v537 = vpack.c.b16 %v522, %v521
    %v538 = vpack.c.b16 %v524, %v523
    %v539 = vpack.c.b16 %v526, %v525
    %v540 = vpack.c.b16 %v528, %v527
    %v541 = vpack.c.b16 %v530, %v529
    %v542 = vpack.c.b16 %v532, %v531
    %v543 = vpack.c.b16 %v534, %v533
    %v544 = vpack.c.b16 %v536, %v535
    %553 = vmatprep.subr.bf16.mxu0 0
    %554 = vmatpush1.bf16.msra.mxu0 %v537
    %555 = vmatprep.subr.bf16.mxu0 0
    %556 = vmatpush1.bf16.msra.mxu0 %v538
    %557 = vmatprep.subr.bf16.mxu0 0
    %558 = vmatpush1.bf16.msra.mxu0 %v539
    %559 = vmatprep.subr.bf16.mxu0 0
    %560 = vmatpush1.bf16.msra.mxu0 %v540
    %561 = vmatprep.subr.bf16.mxu0 0
    %562 = vmatpush1.bf16.msra.mxu0 %v541
    %563 = vmatprep.subr.bf16.mxu0 0
    %564 = vmatpush1.bf16.msra.mxu0 %v542
    %565 = vmatprep.subr.bf16.mxu0 0
    %566 = vmatpush1.bf16.msra.mxu0 %v543
    %567 = vmatprep.subr.bf16.mxu0 0
    %568 = vmatpush1.bf16.msra.mxu0 %v544
    %569 = vmatprep.subr.bf16.mxu0 0
    %570 = vmatpush1.bf16.msra.mxu0 0
    %571 = vmatprep.subr.bf16.mxu0 0
    %572 = vmatpush1.bf16.msra.mxu0 0
    %573 = vmatprep.subr.bf16.mxu0 0
    %574 = vmatpush1.bf16.msra.mxu0 0
    %575 = vmatprep.subr.bf16.mxu0 0
    %576 = vmatpush1.bf16.msra.mxu0 0
    %577 = vmatprep.subr.bf16.mxu0 0
    %578 = vmatpush1.bf16.msra.mxu0 0
    %579 = vmatprep.subr.bf16.mxu0 0
    %580 = vmatpush1.bf16.msra.mxu0 0
    %581 = vmatprep.subr.bf16.mxu0 0
    %582 = vmatpush1.bf16.msra.mxu0 0
    %583 = vmatprep.subr.bf16.mxu0 0
    %584 = vmatpush1.bf16.msra.mxu0 0
    %585 = vmatprep.mubr.bf16.mxu0 0
    %586 = vmatmul.mubr.bf16.gmra.mrb[0].mxu0 %v483
    %v587 = vpop.f32.mrb[0].mxu0
    %v588 = vadd.f32 %v504, %v587
    %v589 = vpop.f32.mrb[0].mxu0
    %v590 = vpop.f32.mrb[0].mxu0
    %v591 = vpop.f32.mrb[0].mxu0
    %592 = vdwg.mxu0
    %v593 = vmax.f32 %v588, 0.0
    %v594 = vld [vmem:[%s2 + $0x5] sm:$0x1]
    %v595 = vlaneseq
    %v596 = vshrl.u32 %v595, 7
    %v597 = vsub.s32 0, %v596
    %v598 = vrot.slane %v594, %v597
    %v599 = vmul.f32 %v593, %v598
    %600 = vadd.xlane.f32.xlu0 %v599
    %v601 = vpop.xlane.xlu0 %600
    %v602 = vld [vmem:[%s2 + $0x6] sm:$0x1]
    %v603 = vlaneseq
    %v604 = vshrl.u32 %v603, 7
    %v605 = vsub.s32 0, %v604
    %v606 = vrot.slane %v602, %v605
    %v607 = vadd.f32 %v601, %v606
    %v608 = vxor.u32 %v607, 2147483648
    %v609 = vmul.f32 %v608, 1.442695
    %v610 = vpow.pop %v609
    %v611 = vadd.f32 %v610, 1.0
    %v612 = vrcp.pop %v611
    %v613 = vmul.f32 1.0, %v612
    %vm614 = vcmask 7168
    %615 = vst.msk [vmem:[%s3] sm:$0xff] %vm614, %v613
    // Predicated region
    $region18: #{ncf_forward.1} parent=1 // pred_check
      _
    $region19: #{ncf_forward.1} parent=1 // pred_check_branch
      %617 = sbr.rel (0) target = $region21
    $region20: #{ncf_forward.1} parent=1 // pred_region
      _
    $region21: #{ncf_forward.1} parent=1 // pred_fallthru
      _
    // Predicated region
    $region22: #{ncf_forward.1} parent=1 // pred_check
      _
    $region23: #{ncf_forward.1} parent=1 // pred_check_branch
      %619 = sbr.rel (0) target = $region25
    $region24: #{ncf_forward.1} parent=1 // pred_region
      _
    $region25: #{ncf_forward.1} parent=1 // pred_fallthru
      _
    %620 = vsyncpa [#allocation3], 1

</llo_original>
